<compile_context>
chip_gen: v5e
topology: v5e:2x2
jax: 0.10.0
libtpu: 0.0.40
codegen_flags: <defaults>
</compile_context>

<pallas_src>
import jax
import jax.numpy as jnp
from jax import lax
from jax.experimental import pallas as pl
from jax.experimental.pallas import tpu as pltpu


def _round_up(x, m):
    return ((x + m - 1) // m) * m


# Large finite negative: exp(_NEG - m) == 0.0 exactly, and 0 * _NEG == 0
# (a literal -inf here would turn sum(mask * c) into NaN for masked entries).
_NEG = -1e30


def _default_block():
    """MXU-native tile width: 128 on v2-v5 (128x128 MXU), 256 on v6e/v7x."""
    try:
        kind = jax.devices()[0].device_kind.lower()
    except Exception:
        return 256
    if any(t in kind for t in ("v2", "v3", "v4", "v5")):
        return 128
    return 256


def _supcon_kernel(b_valid, b_pad, tm, tn, num_k, scale):
    """Kernel factory.

    b_valid: number of real rows/columns (B).  Baked into the closure, so a
             new B recompiles (the padded shapes change anyway).
    scale:   None if 1/temperature was folded into the row operand in the
             wrapper (bf16 path), else the scalar to multiply the Gram tile by
             (f32 debug path).
    """
    pad_cols = b_pad != b_valid

    def kernel(fr_ref, fct_ref, lc_ref, lr_ref, cnt_ref, out_ref,
               m_sc, l_sc, sml_sc, *acc):
        i = pl.program_id(0)                 # row-tile index    ("parallel")
        j = pl.program_id(1)                 # column-tile index ("arbitrary")
        last_j = pl.num_programs(1) - 1
        if num_k > 1:
            k = pl.program_id(2)             # K-tile index      ("arbitrary")
            last_k = pl.num_programs(2) - 1

        # ---- init the per-row online-softmax state at the first (j, k) step
        init = (j == 0) if num_k == 1 else jnp.logical_and(j == 0, k == 0)

        @pl.when(init)
        def _():
            m_sc[...] = jnp.full_like(m_sc, _NEG)
            l_sc[...] = jnp.zeros_like(l_sc)
            sml_sc[...] = jnp.zeros_like(sml_sc)

        def update(c):
            # c: [tm, tn] f32 Gram tile (contrast * 1/T once `scale` applied).
            if scale is not None:
                c = c * scale

            # (tm,1) / (1,tn) iotas only; never a full [tm,tn] int tile.
            row_ids = i * tm + lax.broadcasted_iota(jnp.int32, (tm, 1), 0)
            col_ids = j * tn + lax.broadcasted_iota(jnp.int32, (1, tn), 1)

            # positives mask: broadcast-compare of the two label orientations.
            mask = lc_ref[...] == lr_ref[...]                     # [tm, tn]
            if pad_cols:  # compiled in only when B was padded
                col_valid = col_ids < b_valid                     # (1, tn)
                c = jnp.where(col_valid, c, _NEG)                 # drop pad cols
                mask = jnp.logical_and(mask, col_valid)
            maskf = mask.astype(jnp.float32)

            # online row max (diagonal included, exactly as in the reference)
            m_prev = m_sc[...]
            m_new = jnp.maximum(m_prev, jnp.max(c, axis=1, keepdims=True))

            # denominator excludes self-similarity: push the diagonal to _NEG
            # so exp() underflows to exactly 0 (only hits on i == j tiles).
            c_den = jnp.where(row_ids == col_ids, _NEG, c)

            alpha = jnp.exp(m_prev - m_new)
            l_sc[...] = alpha * l_sc[...] + jnp.sum(
                jnp.exp(c_den - m_new), axis=1, keepdims=True)
            # NB: relies on 0 * _NEG == 0 for masked/padded entries (finite,
            # not -inf).
            sml_sc[...] = sml_sc[...] + jnp.sum(maskf * c, axis=1,
                                                keepdims=True)
            m_sc[...] = m_new

        if num_k == 1:
            # single K step: feed the MXU result straight into the update, no
            # [tm,tn] scratch round-trip.
            update(jnp.dot(fr_ref[...], fct_ref[...],
                           preferred_element_type=jnp.float32))
            done = j == last_j
        else:
            acc_sc = acc[0]

            @pl.when(k == 0)
            def _():
                acc_sc[...] = jnp.zeros_like(acc_sc)

            acc_sc[...] += jnp.dot(fr_ref[...], fct_ref[...],
                                   preferred_element_type=jnp.float32)

            @pl.when(k == last_k)
            def _():
                update(acc_sc[...])

            done = jnp.logical_and(j == last_j, k == last_k)

        @pl.when(done)
        def _():
            # sum_j mask*log_prob = sum(mask*c) - cnt*m - cnt*log(l+eps)
            # => mean_log_prob_pos = sml/cnt - m - log(l + eps)
            out_ref[...] = (sml_sc[...] / cnt_ref[...]
                            - m_sc[...]
                            - jnp.log(l_sc[...] + 1e-12))

    return kernel


def supcon_loss(features, labels, temperature=0.07, *, block=None,
                compute_dtype=jnp.bfloat16, k_block=2048,
                extra_col_buffering=False):
    """SupConLoss forward.  features: [B, D], labels: [B] int -> f32 scalar.

    compute_dtype=bfloat16 (default) feeds the MXU at native precision (2-4x
    matmul throughput, half the HBM/VMEM bytes); features are typically
    L2-normalized so the logits stay well conditioned.  Use jnp.float32 for
    tight agreement with an f32 reference.
    """
    B, D = features.shape
    if block is None:
        block = _default_block()

    # ---- tile selection --------------------------------------------------
    if B <= block:
        b_pad = _round_up(B, 128)   # lane-dense column dimension
        tn = b_pad                  # single column tile
        tm = b_pad // 2             # >=2 row tiles so the "parallel" axis
                                    # spans both TensorCores on v7x
    else:
        tm = tn = block
        b_pad = _round_up(B, block)

    d_pad = _round_up(D, 128)
    if d_pad > k_block:             # K-axis blocking for large D so the
        tk = k_block                # double-buffered feature tiles stay well
        d_pad = _round_up(d_pad, k_block)  # inside v7x's 64 MiB VMEM
    else:
        tk = d_pad
    num_k = d_pad // tk

    # ---- operand preparation ----------------------------------------------
    inv_t = 1.0 / float(temperature)
    f32 = features.astype(jnp.float32)
    fpad = jnp.pad(f32, ((0, b_pad - B), (0, d_pad - D)))

    # Fold 1/T into ONE operand when casting down to bf16 (O(B*D) once instead
    # of an O(B^2) full-tile multiply per grid step; it fuses into the cast).
    # On the f32 path keep the multiply in-kernel so numerics track a plain
    # f32 reference regardless of the backend's default matmul precision.
    fold_scale = jnp.dtype(compute_dtype) != jnp.dtype(jnp.float32)
    if fold_scale:
        f_row = (fpad * inv_t).astype(compute_dtype)
        scale = None
    else:
        f_row = fpad.astype(compute_dtype)
        scale = inv_t
    # Pre-transposed column operand: the in-kernel contraction is then a plain
    # [tm,tk] @ [tk,tn] MXU matmul with no per-tile transpose / relayout.
    f_colT = fpad.astype(compute_dtype).T

    lab = labels.reshape(-1).astype(jnp.int32)
    # Per-row positive count (the reference mask INCLUDES the self pair), done
    # once in the wrapper; removes one cross-lane reduction per tile.  O(B^2)
    # bool compare, negligible next to the O(B^2 D) matmul.
    cnt = jnp.sum((lab[:, None] == lab[None, :]).astype(jnp.float32), axis=1)
    cnt = jnp.pad(cnt, (0, b_pad - B), constant_values=1.0).reshape(b_pad, 1)
    lab_p = jnp.pad(lab, (0, b_pad - B), constant_values=-1)
    lab_col = lab_p.reshape(b_pad, 1)
    lab_row = lab_p.reshape(1, b_pad)

    grid = (b_pad // tm, b_pad // tn, num_k)

    # Scoped-VMEM budget: double-buffered feature tiles + scratch + headroom,
    # capped at 64 MiB so the same number stays safe on v7x (64 MiB physical;
    # v5e/v6e have 128 MiB so the cap is never the problem there).
    isz = jnp.dtype(compute_dtype).itemsize
    need = 2 * (tm * tk + tk * tn) * isz + 3 * tm * 4
    if num_k > 1:
        need += tm * tn * 4
    vmem_limit = int(min(max(need + (8 << 20), 32 << 20), 64 << 20))

    fct_kwargs = {}
    if extra_col_buffering:
        # Deeper pipelining of the column-feature stream; worth sweeping when
        # d_pad is small and the per-step compute is short.
        fct_kwargs["pipeline_mode"] = pl.Buffered(3)

    scratch = [pltpu.VMEM((tm, 1), jnp.float32)] * 3      # m, l, sum(mask*c)
    if num_k > 1:
        scratch.append(pltpu.VMEM((tm, tn), jnp.float32))  # Gram accumulator

    # TODO(synk): for small B*D (esp. v5e) a fully VMEM-resident column
    # operand (BlockSpec((d_pad, b_pad), lambda i,j,k: (0,0)) + pl.ds slicing)
    # would cut the key-matrix HBM re-streaming from (1+b_pad/tm)*B*D to ~2*B*D.
    per_row = pl.pallas_call(
        _supcon_kernel(B, b_pad, tm, tn, num_k, scale),
        out_shape=jax.ShapeDtypeStruct((b_pad, 1), jnp.float32),
        grid_spec=pltpu.PrefetchScalarGridSpec(
            num_scalar_prefetch=0,
            grid=grid,
            in_specs=[
                pl.BlockSpec((tm, tk), lambda i, j, k: (i, k)),   # query rows
                pl.BlockSpec((tk, tn), lambda i, j, k: (k, j),    # keys (D,B)
                             **fct_kwargs),
                pl.BlockSpec((tm, 1), lambda i, j, k: (i, 0)),    # labels [B,1]
                pl.BlockSpec((1, tn), lambda i, j, k: (0, j)),    # labels [1,B]
                pl.BlockSpec((tm, 1), lambda i, j, k: (i, 0)),    # pos counts
            ],
            out_specs=pl.BlockSpec((tm, 1), lambda i, j, k: (i, 0)),
            scratch_shapes=scratch,
        ),
        compiler_params=pltpu.CompilerParams(
            dimension_semantics=("parallel", "arbitrary", "arbitrary"),
            vmem_limit_bytes=vmem_limit),
    )(f_row, f_colT, lab_col, lab_row, cnt)

    # Tiny final reduction over the B valid rows, kept outside the kernel so
    # the row-tile grid axis can stay "parallel" (both TensorCores on v7x).
    return -jnp.mean(per_row[:B, 0])


def supcon_loss_ref(features, labels, temperature=0.07):
    """Plain-JAX reference mirroring the PyTorch module."""
    f = features.astype(jnp.float32)
    B = f.shape[0]
    lab = labels.reshape(-1, 1)
    mask = (lab == lab.T).astype(jnp.float32)
    contrast = (f @ f.T) / temperature
    logits = contrast - jnp.max(contrast, axis=1, keepdims=True)
    exp_logits = jnp.exp(logits) * (1.0 - jnp.eye(B, dtype=jnp.float32))
    log_prob = logits - jnp.log(jnp.sum(exp_logits, axis=1, keepdims=True) + 1e-12)
    mean_log_prob_pos = jnp.sum(mask * log_prob, axis=1) / jnp.sum(mask, axis=1)
    return -jnp.mean(mean_log_prob_pos)


if __name__ == "__main__":
    key = jax.random.PRNGKey(0)
    kf, kl, kf2, kl2, kf3, kl3 = jax.random.split(key, 6)

    # small, module-consistent shapes: a batch of embeddings + int labels
    B, D = 8, 32
    feats = jax.random.normal(kf, (B, D), dtype=jnp.float32)
    feats = feats / jnp.linalg.norm(feats, axis=1, keepdims=True)
    labels = jax.random.randint(kl, (B,), 0, 3, dtype=jnp.int32)

    loss = jax.block_until_ready(
        supcon_loss(feats, labels, temperature=0.07, compute_dtype=jnp.float32))
    loss_ref = supcon_loss_ref(feats, labels, temperature=0.07)
    assert jnp.allclose(loss, loss_ref, rtol=1e-4, atol=1e-4), (loss, loss_ref)

    # padded / multi-row-tile path (B and D unaligned), f32 for a tight check
    B2, D2 = 200, 48
    feats2 = jax.random.normal(kf2, (B2, D2), dtype=jnp.float32)
    feats2 = feats2 / jnp.linalg.norm(feats2, axis=1, keepdims=True)
    labels2 = jax.random.randint(kl2, (B2,), 0, 5, dtype=jnp.int32)

    loss2 = jax.block_until_ready(
        supcon_loss(feats2, labels2, temperature=0.07, compute_dtype=jnp.float32))
    loss2_ref = supcon_loss_ref(feats2, labels2, temperature=0.07)
    assert jnp.allclose(loss2, loss2_ref, rtol=1e-4, atol=1e-4), (loss2, loss2_ref)

    # default bf16 MXU path (perf configuration): loose tolerance vs f32 ref
    loss2_bf16 = jax.block_until_ready(
        supcon_loss(feats2, labels2, temperature=0.07))
    assert jnp.isfinite(loss2_bf16)
    assert jnp.allclose(loss2_bf16, loss2_ref, rtol=2e-2, atol=5e-2), (
        loss2_bf16, loss2_ref)

    # K-blocked (large-D) path: small k_block forces num_k > 1 (accumulator)
    B3, D3 = 96, 300
    feats3 = jax.random.normal(kf3, (B3, D3), dtype=jnp.float32)
    feats3 = feats3 / jnp.linalg.norm(feats3, axis=1, keepdims=True)
    labels3 = jax.random.randint(kl3, (B3,), 0, 4, dtype=jnp.int32)

    loss3 = jax.block_until_ready(
        supcon_loss(feats3, labels3, temperature=0.07,
                    compute_dtype=jnp.float32, k_block=128))
    loss3_ref = supcon_loss_ref(feats3, labels3, temperature=0.07)
    assert jnp.allclose(loss3, loss3_ref, rtol=1e-4, atol=1e-4), (loss3, loss3_ref)

    print("KERNEL_OK")
</pallas_src>

<mosaic_0001>
module attributes {stable_mosaic.version = 11 : i64} {
  func.func @kernel(%arg0: i32, %arg1: i32, %arg2: i32, %arg3: memref<64x128xf32, #tpu.memory_space<vmem>>, %arg4: memref<128x128xf32, #tpu.memory_space<vmem>>, %arg5: memref<64x1xi32, #tpu.memory_space<vmem>>, %arg6: memref<1x128xi32, #tpu.memory_space<vmem>>, %arg7: memref<64x1xf32, #tpu.memory_space<vmem>>, %arg8: memref<64x1xf32, #tpu.memory_space<vmem>>, %arg9: memref<64x1xf32, #tpu.memory_space<vmem>>, %arg10: memref<64x1xf32, #tpu.memory_space<vmem>>, %arg11: memref<64x1xf32, #tpu.memory_space<vmem>>) attributes {dimension_semantics = [#tpu.dimension_semantics<parallel>, #tpu.dimension_semantics<arbitrary>, #tpu.dimension_semantics<arbitrary>], iteration_bounds = array<i64: 2, 1, 1>, scalar_prefetch = 0 : i64, scratch_operands = 3 : i64, tpu.core_type = #tpu.core_type<tc>, window_params = [{transform_indices = @transform_0, window_bounds = array<i64: 64, 128>}, {transform_indices = @transform_1, window_bounds = array<i64: 128, 128>}, {transform_indices = @transform_2, window_bounds = array<i64: 64, 1>}, {transform_indices = @transform_3, window_bounds = array<i64: 1, 128>}, {transform_indices = @transform_4, window_bounds = array<i64: 64, 1>}, {transform_indices = @transform_5, window_bounds = array<i64: 64, 1>}]} {
    %c0_i32 = arith.constant 0 : i32
    %0 = arith.cmpi eq, %arg1, %c0_i32 : i32
    %1 = arith.extui %0 : i1 to i32
    %c0_i32_0 = arith.constant 0 : i32
    %2 = arith.cmpi ne, %1, %c0_i32_0 : i32
    scf.if %2 {
      %cst_28 = arith.constant -1.000000e+30 : f32
      %61 = vector.broadcast %cst_28 : f32 to vector<64x1xf32>
      %c0_29 = arith.constant 0 : index
      %c0_30 = arith.constant 0 : index
      %62 = vector.load %arg9[%c0_29, %c0_30] : memref<64x1xf32, #tpu.memory_space<vmem>>, vector<64x1xf32>
      tpu.vector_store %arg9[%c0_29, %c0_30], %61 {strides = array<i32>} : memref<64x1xf32, #tpu.memory_space<vmem>>, vector<64x1xf32>,
      %cst_31 = arith.constant 0.000000e+00 : f32
      %63 = vector.broadcast %cst_31 : f32 to vector<64x1xf32>
      %c0_32 = arith.constant 0 : index
      %c0_33 = arith.constant 0 : index
      %64 = vector.load %arg10[%c0_32, %c0_33] : memref<64x1xf32, #tpu.memory_space<vmem>>, vector<64x1xf32>
      tpu.vector_store %arg10[%c0_32, %c0_33], %63 {strides = array<i32>} : memref<64x1xf32, #tpu.memory_space<vmem>>, vector<64x1xf32>,
      %cst_34 = arith.constant 0.000000e+00 : f32
      %65 = vector.broadcast %cst_34 : f32 to vector<64x1xf32>
      %c0_35 = arith.constant 0 : index
      %c0_36 = arith.constant 0 : index
      %66 = vector.load %arg11[%c0_35, %c0_36] : memref<64x1xf32, #tpu.memory_space<vmem>>, vector<64x1xf32>
      tpu.vector_store %arg11[%c0_35, %c0_36], %65 {strides = array<i32>} : memref<64x1xf32, #tpu.memory_space<vmem>>, vector<64x1xf32>,
    } else {
    }
    %c0 = arith.constant 0 : index
    %c0_1 = arith.constant 0 : index
    %3 = vector.load %arg3[%c0, %c0_1] : memref<64x128xf32, #tpu.memory_space<vmem>>, vector<64x128xf32>
    %c0_2 = arith.constant 0 : index
    %c0_3 = arith.constant 0 : index
    %4 = vector.load %arg4[%c0_2, %c0_3] : memref<128x128xf32, #tpu.memory_space<vmem>>, vector<128x128xf32>
    %cst = arith.constant dense<0.000000e+00> : vector<64x128xf32>
    %5 = tpu.matmul %3, %4, %cst {dimension_numbers = #tpu.dot_dimension_numbers<[1], [0], [0], [1], [0, 0, 1, 1], [], []>} : vector<64x128xf32>, vector<128x128xf32>, vector<64x128xf32> -> vector<64x128xf32>
    %cst_4 = arith.constant 14.2857141 : f32
    %6 = vector.broadcast %cst_4 : f32 to vector<64x128xf32>
    %7 = arith.mulf %5, %6 : vector<64x128xf32>
    %c64_i32 = arith.constant 64 : i32
    %8 = arith.muli %arg0, %c64_i32 : i32
    %9 = tpu.iota {dimensions = array<i32: 0>} : vector<64x1xi32>
    %10 = vector.broadcast %8 : i32 to vector<64x1xi32>
    %11 = arith.addi %10, %9 : vector<64x1xi32>
    %c128_i32 = arith.constant 128 : i32
    %12 = arith.muli %arg1, %c128_i32 : i32
    %13 = tpu.iota {dimensions = array<i32: 1>} : vector<1x128xi32>
    %14 = vector.broadcast %12 : i32 to vector<1x128xi32>
    %15 = arith.addi %14, %13 : vector<1x128xi32>
    %c0_5 = arith.constant 0 : index
    %c0_6 = arith.constant 0 : index
    %16 = vector.load %arg5[%c0_5, %c0_6] : memref<64x1xi32, #tpu.memory_space<vmem>>, vector<64x1xi32>
    %c0_7 = arith.constant 0 : index
    %c0_8 = arith.constant 0 : index
    %17 = vector.load %arg6[%c0_7, %c0_8] : memref<1x128xi32, #tpu.memory_space<vmem>>, vector<1x128xi32>
    %18 = vector.broadcast %16 : vector<64x1xi32> to vector<64x128xi32>
    %19 = vector.broadcast %17 : vector<1x128xi32> to vector<64x128xi32>
    %20 = arith.cmpi eq, %18, %19 : vector<64x128xi32>
    %c8_i32 = arith.constant 8 : i32
    %21 = vector.broadcast %c8_i32 : i32 to vector<1x128xi32>
    %22 = arith.cmpi slt, %15, %21 : vector<1x128xi32>
    %cst_9 = arith.constant -1.000000e+30 : f32
    %23 = vector.shape_cast %22 : vector<1x128xi1> to vector<1x128xi1>
    %24 = vector.broadcast %23 : vector<1x128xi1> to vector<64x128xi1>
    %25 = vector.broadcast %cst_9 : f32 to vector<64x128xf32>
    %26 = arith.select %24, %7, %25 : vector<64x128xi1>, vector<64x128xf32>
    %27 = vector.broadcast %22 : vector<1x128xi1> to vector<64x128xi1>
    %28 = arith.andi %20, %27 : vector<64x128xi1>
    %29 = arith.extui %28 : vector<64x128xi1> to vector<64x128xi32>
    %30 = arith.sitofp %29 : vector<64x128xi32> to vector<64x128xf32>
    %c0_10 = arith.constant 0 : index
    %c0_11 = arith.constant 0 : index
    %31 = vector.load %arg9[%c0_10, %c0_11] : memref<64x1xf32, #tpu.memory_space<vmem>>, vector<64x1xf32>
    %cst_12 = arith.constant dense<0xFF800000> : vector<64xf32>
    %32 = vector.multi_reduction <maximumf>, %26, %cst_12 [1] : vector<64x128xf32> to vector<64xf32>
    %33 = vector.shape_cast %32 : vector<64xf32> to vector<64x1xf32>
    %34 = arith.maximumf %31, %33 : vector<64x1xf32>
    %35 = vector.broadcast %11 : vector<64x1xi32> to vector<64x128xi32>
    %36 = vector.broadcast %15 : vector<1x128xi32> to vector<64x128xi32>
    %37 = arith.cmpi eq, %35, %36 : vector<64x128xi32>
    %cst_13 = arith.constant -1.000000e+30 : f32
    %38 = vector.broadcast %cst_13 : f32 to vector<64x128xf32>
    %39 = arith.select %37, %38, %26 : vector<64x128xi1>, vector<64x128xf32>
    %40 = arith.subf %31, %34 : vector<64x1xf32>
    %41 = math.exp %40 : vector<64x1xf32>
    %c0_14 = arith.constant 0 : index
    %c0_15 = arith.constant 0 : index
    %42 = vector.load %arg10[%c0_14, %c0_15] : memref<64x1xf32, #tpu.memory_space<vmem>>, vector<64x1xf32>
    %43 = arith.mulf %41, %42 : vector<64x1xf32>
    %44 = vector.broadcast %34 : vector<64x1xf32> to vector<64x128xf32>
    %45 = arith.subf %39, %44 : vector<64x128xf32>
    %46 = math.exp %45 : vector<64x128xf32>
    %cst_16 = arith.constant dense<0.000000e+00> : vector<64xf32>
    %47 = vector.multi_reduction <add>, %46, %cst_16 [1] : vector<64x128xf32> to vector<64xf32>
    %48 = vector.shape_cast %47 : vector<64xf32> to vector<64x1xf32>
    %49 = arith.addf %43, %48 : vector<64x1xf32>
    %c0_17 = arith.constant 0 : index
    %c0_18 = arith.constant 0 : index
    %50 = vector.load %arg10[%c0_17, %c0_18] : memref<64x1xf32, #tpu.memory_space<vmem>>, vector<64x1xf32>
    tpu.vector_store %arg10[%c0_17, %c0_18], %49 {strides = array<i32>} : memref<64x1xf32, #tpu.memory_space<vmem>>, vector<64x1xf32>,
    %c0_19 = arith.constant 0 : index
    %c0_20 = arith.constant 0 : index
    %51 = vector.load %arg11[%c0_19, %c0_20] : memref<64x1xf32, #tpu.memory_space<vmem>>, vector<64x1xf32>
    %52 = arith.mulf %30, %26 : vector<64x128xf32>
    %cst_21 = arith.constant dense<0.000000e+00> : vector<64xf32>
    %53 = vector.multi_reduction <add>, %52, %cst_21 [1] : vector<64x128xf32> to vector<64xf32>
    %54 = vector.shape_cast %53 : vector<64xf32> to vector<64x1xf32>
    %55 = arith.addf %51, %54 : vector<64x1xf32>
    %c0_22 = arith.constant 0 : index
    %c0_23 = arith.constant 0 : index
    %56 = vector.load %arg11[%c0_22, %c0_23] : memref<64x1xf32, #tpu.memory_space<vmem>>, vector<64x1xf32>
    tpu.vector_store %arg11[%c0_22, %c0_23], %55 {strides = array<i32>} : memref<64x1xf32, #tpu.memory_space<vmem>>, vector<64x1xf32>,
    %c0_24 = arith.constant 0 : index
    %c0_25 = arith.constant 0 : index
    %57 = vector.load %arg9[%c0_24, %c0_25] : memref<64x1xf32, #tpu.memory_space<vmem>>, vector<64x1xf32>
    tpu.vector_store %arg9[%c0_24, %c0_25], %34 {strides = array<i32>} : memref<64x1xf32, #tpu.memory_space<vmem>>, vector<64x1xf32>,
    %c0_i32_26 = arith.constant 0 : i32
    %58 = arith.cmpi eq, %arg1, %c0_i32_26 : i32
    %59 = arith.extui %58 : i1 to i32
    %c0_i32_27 = arith.constant 0 : i32
    %60 = arith.cmpi ne, %59, %c0_i32_27 : i32
    scf.if %60 {
      %c0_28 = arith.constant 0 : index
      %c0_29 = arith.constant 0 : index
      %61 = vector.load %arg11[%c0_28, %c0_29] : memref<64x1xf32, #tpu.memory_space<vmem>>, vector<64x1xf32>
      %c0_30 = arith.constant 0 : index
      %c0_31 = arith.constant 0 : index
      %62 = vector.load %arg7[%c0_30, %c0_31] : memref<64x1xf32, #tpu.memory_space<vmem>>, vector<64x1xf32>
      %63 = arith.divf %61, %62 : vector<64x1xf32>
      %c0_32 = arith.constant 0 : index
      %c0_33 = arith.constant 0 : index
      %64 = vector.load %arg9[%c0_32, %c0_33] : memref<64x1xf32, #tpu.memory_space<vmem>>, vector<64x1xf32>
      %65 = arith.subf %63, %64 : vector<64x1xf32>
      %c0_34 = arith.constant 0 : index
      %c0_35 = arith.constant 0 : index
      %66 = vector.load %arg10[%c0_34, %c0_35] : memref<64x1xf32, #tpu.memory_space<vmem>>, vector<64x1xf32>
      %cst_36 = arith.constant 9.99999996E-13 : f32
      %67 = vector.broadcast %cst_36 : f32 to vector<64x1xf32>
      %68 = arith.addf %66, %67 : vector<64x1xf32>
      %69 = math.log %68 : vector<64x1xf32>
      %70 = arith.subf %65, %69 : vector<64x1xf32>
      %c0_37 = arith.constant 0 : index
      %c0_38 = arith.constant 0 : index
      %71 = vector.load %arg8[%c0_37, %c0_38] : memref<64x1xf32, #tpu.memory_space<vmem>>, vector<64x1xf32>
      tpu.vector_store %arg8[%c0_37, %c0_38], %70 {strides = array<i32>} : memref<64x1xf32, #tpu.memory_space<vmem>>, vector<64x1xf32>,
    } else {
    }
    return
  }
  func.func @transform_0(%arg0: i32, %arg1: i32, %arg2: i32) -> (i32, i32) {
    %c0_i32 = arith.constant 0 : i32
    return %arg0, %arg2 : i32, i32
  }
  func.func @transform_1(%arg0: i32, %arg1: i32, %arg2: i32) -> (i32, i32) {
    %c0_i32 = arith.constant 0 : i32
    return %arg2, %arg1 : i32, i32
  }
  func.func @transform_2(%arg0: i32, %arg1: i32, %arg2: i32) -> (i32, i32) {
    %c0_i32 = arith.constant 0 : i32
    %c0_i32_0 = arith.constant 0 : i32
    return %arg0, %c0_i32 : i32, i32
  }
  func.func @transform_3(%arg0: i32, %arg1: i32, %arg2: i32) -> (i32, i32) {
    %c0_i32 = arith.constant 0 : i32
    %c0_i32_0 = arith.constant 0 : i32
    return %c0_i32, %arg1 : i32, i32
  }
  func.func @transform_4(%arg0: i32, %arg1: i32, %arg2: i32) -> (i32, i32) {
    %c0_i32 = arith.constant 0 : i32
    %c0_i32_0 = arith.constant 0 : i32
    return %arg0, %c0_i32 : i32, i32
  }
  func.func @transform_5(%arg0: i32, %arg1: i32, %arg2: i32) -> (i32, i32) {
    %c0_i32 = arith.constant 0 : i32
    %c0_i32_0 = arith.constant 0 : i32
    return %arg0, %c0_i32 : i32, i32
  }
}

</mosaic_0001>

<llo_original>
// kernel: tpu_custom_call.1
$region0: #{tpu_custom_call.1}
  #allocation0 [shape = 'u32[]', space=smem, size = 0x4, offset = 0x4, fixed_abs, tag = 'smem constant byte address 0x4 - core index']
  #allocation1 [shape = 'u32[72,128]{1,0:T(1,128)}', space=vmem, size = 0x9000, scoped, tag = 'internal scratch']
  #allocation2 [shape = 'f32[64,1]{1,0:T(8,128)}', space=vmem, size = 0x8000, scoped, tag = 'scratch operand']
  #allocation3 [shape = 'f32[64,1]{1,0:T(8,128)}', space=vmem, size = 0x8000, scoped, tag = 'scratch operand']
  #allocation4 [shape = 'f32[64,1]{1,0:T(8,128)}', space=vmem, size = 0x8000, scoped, tag = 'scratch operand']
  %s0 = inlined_call_operand.vmem [shape: f32[128,128], index: 0, kind: input, shape index: {}]
  %s1 = inlined_call_operand.vmem [shape: f32[128,128], index: 1, kind: input, shape index: {}]
  %s2 = inlined_call_operand.vmem [shape: s32[128,1], index: 2, kind: input, shape index: {}]
  %s3 = inlined_call_operand.vmem [shape: s32[1,128], index: 3, kind: input, shape index: {}]
  %s4 = inlined_call_operand.vmem [shape: f32[128,1], index: 4, kind: input, shape index: {}]
  %s5 = inlined_call_operand.vmem [shape: f32[128,1], index: 5, kind: output, shape index: {}]
  %s6 = sld [smem:[#allocation0]]
  $region61: #{tpu_custom_call.1} parent=0
    _
  %s8 = ssub.s32 1, %s6
  %s9 = scalar_select 0, %s8, %s6
  loop: start=0, step=1, limit=4
  $region2: #{tpu_custom_call.1} parent=0 // loop_pre_header
    _
  $region3: #{tpu_custom_call.1} parent=0 // loop_header
    %s11 = sphi 0, %s15
    %p12 = scmp.ge.s32.totalorder %s11, 4
    %s18 = sphi 0, %s37
    %s19 = sphi 0, %s33
    %s20 = sphi 0, %s29
    %s21 = sphi 0, %s18
    %s22 = sphi 0, %s19
    %s23 = sphi 0, %s20
    %s24 = sphi 0, %s21
    %s25 = sphi 0, %s22
    %s26 = sphi 0, %s23
    %s42 = sphi 0, %s44
    %s45 = sphi 0, %s42
    %s46 = sphi 0, %s45
    %s62 = sphi 0, %s46
    %s70 = sphi 0, %s72
    %s73 = sphi 0, %s70
    %s74 = sphi 0, %s73
    %s90 = sphi 0, %s74
    %s96 = sphi 0, %s98
    %s99 = sphi 0, %s96
    %s100 = sphi 0, %s99
    %s116 = sphi 0, %s100
    %s122 = sphi 0, %s124
    %s125 = sphi 0, %s122
    %s126 = sphi 0, %s125
    %s142 = sphi 0, %s126
    %s148 = sphi 0, %s150
    %s151 = sphi 0, %s148
    %s152 = sphi 0, %s151
    %s168 = sphi 0, %s152
    %s174 = sphi 0, %s176
    %s177 = sphi 0, %s174
    %s178 = sphi 0, %s177
    %s194 = sphi 0, %s178
  $region4: #{tpu_custom_call.1} parent=0 // loop_header_branch
    %14 = sbr.rel (%p12) target = $region8
  $region5: #{tpu_custom_call.1} parent=0 // loop_body
    %s16 = ssub.s32 %s11, 1
    %s17 = ssub.s32 %s11, 2
    %s27 = sadd.s32 1, %s20
    %p28 = scmp.ge.s32.totalorder %s27, 1
    %s29 = scalar_select %p28, 0, %s27
    %s30 = sadd.s32 1, %s19
    %s31 = scalar_select %p28, %s30, %s19
    %p32 = scmp.ge.s32.totalorder %s31, 1
    %s33 = scalar_select %p32, 0, %s31
    %s34 = sadd.s32 1, %s18
    %s35 = scalar_select %p32, %s34, %s18
    %p36 = scmp.ge.s32.totalorder %s35, 2
    %s37 = scalar_select %p36, 0, %s35
    %s38 = ssub.s32 %s18, %s37
    %s39 = ssub.s32 %s20, %s29
    %s40 = sor.u32 %s38, %s39
    %p41 = scmp.eq.s32.totalorder %s40, 0
    %s43 = sadd.s32 %s42, 1
    %s44 = scalar_select %p41, %s42, %s43
    %p47 = pneg %p41
    %p48 = scmp.eq.s32.totalorder %s11, 1
    %p49 = por %p47, %p48
    %p50 = scmp.ne.s32.totalorder %s42, %s45
    %p51 = scmp.eq.s32.totalorder %s11, 0
    %p52 = por %p50, %p51
    %p53 = scmp.ne.s32.totalorder %s42, %s45
    %p54 = scmp.eq.s32.totalorder %s16, 1
    %p55 = por %p53, %p54
    %p56 = scmp.ne.s32.totalorder %s45, %s46
    %p57 = scmp.eq.s32.totalorder %s16, 0
    %p58 = por %p56, %p57
    %p59 = scmp.ne.s32.totalorder %s45, %s46
    %p60 = scmp.eq.s32.totalorder %s17, 1
    %p61 = por %p59, %p60
    %p63 = scmp.ne.s32.totalorder %s46, %s62
    %p64 = scmp.eq.s32.totalorder %s17, 0
    %p65 = por %p63, %p64
    %s66 = ssub.s32 %s20, %s29
    %s67 = ssub.s32 %s19, %s33
    %s68 = sor.u32 %s66, %s67
    %p69 = scmp.eq.s32.totalorder %s68, 0
    %s71 = sadd.s32 %s70, 1
    %s72 = scalar_select %p69, %s70, %s71
    %p75 = pneg %p69
    %p76 = scmp.eq.s32.totalorder %s11, 1
    %p77 = por %p75, %p76
    %p78 = scmp.ne.s32.totalorder %s70, %s73
    %p79 = scmp.eq.s32.totalorder %s11, 0
    %p80 = por %p78, %p79
    %p81 = scmp.ne.s32.totalorder %s70, %s73
    %p82 = scmp.eq.s32.totalorder %s16, 1
    %p83 = por %p81, %p82
    %p84 = scmp.ne.s32.totalorder %s73, %s74
    %p85 = scmp.eq.s32.totalorder %s16, 0
    %p86 = por %p84, %p85
    %p87 = scmp.ne.s32.totalorder %s73, %s74
    %p88 = scmp.eq.s32.totalorder %s17, 1
    %p89 = por %p87, %p88
    %p91 = scmp.ne.s32.totalorder %s74, %s90
    %p92 = scmp.eq.s32.totalorder %s17, 0
    %p93 = por %p91, %p92
    %s94 = ssub.s32 %s18, %s37
    %p95 = scmp.eq.s32.totalorder %s94, 0
    %s97 = sadd.s32 %s96, 1
    %s98 = scalar_select %p95, %s96, %s97
    %p101 = pneg %p95
    %p102 = scmp.eq.s32.totalorder %s11, 1
    %p103 = por %p101, %p102
    %p104 = scmp.ne.s32.totalorder %s96, %s99
    %p105 = scmp.eq.s32.totalorder %s11, 0
    %p106 = por %p104, %p105
    %p107 = scmp.ne.s32.totalorder %s96, %s99
    %p108 = scmp.eq.s32.totalorder %s16, 1
    %p109 = por %p107, %p108
    %p110 = scmp.ne.s32.totalorder %s99, %s100
    %p111 = scmp.eq.s32.totalorder %s16, 0
    %p112 = por %p110, %p111
    %p113 = scmp.ne.s32.totalorder %s99, %s100
    %p114 = scmp.eq.s32.totalorder %s17, 1
    %p115 = por %p113, %p114
    %p117 = scmp.ne.s32.totalorder %s100, %s116
    %p118 = scmp.eq.s32.totalorder %s17, 0
    %p119 = por %p117, %p118
    %s120 = ssub.s32 %s19, %s33
    %p121 = scmp.eq.s32.totalorder %s120, 0
    %s123 = sadd.s32 %s122, 1
    %s124 = scalar_select %p121, %s122, %s123
    %p127 = pneg %p121
    %p128 = scmp.eq.s32.totalorder %s11, 1
    %p129 = por %p127, %p128
    %p130 = scmp.ne.s32.totalorder %s122, %s125
    %p131 = scmp.eq.s32.totalorder %s11, 0
    %p132 = por %p130, %p131
    %p133 = scmp.ne.s32.totalorder %s122, %s125
    %p134 = scmp.eq.s32.totalorder %s16, 1
    %p135 = por %p133, %p134
    %p136 = scmp.ne.s32.totalorder %s125, %s126
    %p137 = scmp.eq.s32.totalorder %s16, 0
    %p138 = por %p136, %p137
    %p139 = scmp.ne.s32.totalorder %s125, %s126
    %p140 = scmp.eq.s32.totalorder %s17, 1
    %p141 = por %p139, %p140
    %p143 = scmp.ne.s32.totalorder %s126, %s142
    %p144 = scmp.eq.s32.totalorder %s17, 0
    %p145 = por %p143, %p144
    %s146 = ssub.s32 %s18, %s37
    %p147 = scmp.eq.s32.totalorder %s146, 0
    %s149 = sadd.s32 %s148, 1
    %s150 = scalar_select %p147, %s148, %s149
    %p153 = pneg %p147
    %p154 = scmp.eq.s32.totalorder %s11, 1
    %p155 = por %p153, %p154
    %p156 = scmp.ne.s32.totalorder %s148, %s151
    %p157 = scmp.eq.s32.totalorder %s11, 0
    %p158 = por %p156, %p157
    %p159 = scmp.ne.s32.totalorder %s148, %s151
    %p160 = scmp.eq.s32.totalorder %s16, 1
    %p161 = por %p159, %p160
    %p162 = scmp.ne.s32.totalorder %s151, %s152
    %p163 = scmp.eq.s32.totalorder %s16, 0
    %p164 = por %p162, %p163
    %p165 = scmp.ne.s32.totalorder %s151, %s152
    %p166 = scmp.eq.s32.totalorder %s17, 1
    %p167 = por %p165, %p166
    %p169 = scmp.ne.s32.totalorder %s152, %s168
    %p170 = scmp.eq.s32.totalorder %s17, 0
    %p171 = por %p169, %p170
    %s172 = ssub.s32 %s18, %s37
    %p173 = scmp.eq.s32.totalorder %s172, 0
    %s175 = sadd.s32 %s174, 1
    %s176 = scalar_select %p173, %s174, %s175
    %p179 = pneg %p173
    %p180 = scmp.eq.s32.totalorder %s11, 1
    %p181 = por %p179, %p180
    %p182 = scmp.ne.s32.totalorder %s174, %s177
    %p183 = scmp.eq.s32.totalorder %s11, 0
    %p184 = por %p182, %p183
    %p185 = scmp.ne.s32.totalorder %s174, %s177
    %p186 = scmp.eq.s32.totalorder %s16, 1
    %p187 = por %p185, %p186
    %p188 = scmp.ne.s32.totalorder %s177, %s178
    %p189 = scmp.eq.s32.totalorder %s16, 0
    %p190 = por %p188, %p189
    %p191 = scmp.ne.s32.totalorder %s177, %s178
    %p192 = scmp.eq.s32.totalorder %s17, 1
    %p193 = por %p191, %p192
    %p195 = scmp.ne.s32.totalorder %s178, %s194
    %p196 = scmp.eq.s32.totalorder %s17, 0
    %p197 = por %p195, %p196
    %p198 = scmp.le.s32.totalorder 1, %s11
    %p199 = scmp.lt.s32.totalorder %s11, 3
    %p200 = pnand %p198, %p199
    %p201 = pneg %p200
    // Predicated region
    $region9: #{tpu_custom_call.1} parent=5 // pred_check
      _
    $region10: #{tpu_custom_call.1} parent=5 // pred_check_branch
      %203 = sbr.rel (%p200) target = $region12
    $region11: #{tpu_custom_call.1} parent=5 // pred_region
      %s204 = ssub.s32 %s11, 1
      // Predicated region
      $region13: #{tpu_custom_call.1} parent=11 // pred_check
        %p205 = pneg %p86
      $region14: #{tpu_custom_call.1} parent=11 // pred_check_branch
        %207 = sbr.rel (%p205) target = $region16
      $region15: #{tpu_custom_call.1} parent=11 // pred_region
        %s208 = smul.u32 16, %s23
        %p209 = scmp.lt.s32.totalorder %s208, 15
        %s210 = scalar_select %p209, %s208, 15
        %p211 = scmp.lt.s32.totalorder %s22, 0
        %s212 = scalar_select %p211, %s22, 0
        %s213 = sadd.s32 %s212, %s210
        %s214 = smul.addr %s213, 8
        %s215 = scalar_lea.vmem %s1, %s214
        %s216 = smul.u32 16, %s23
      $region16: #{tpu_custom_call.1} parent=11 // pred_fallthru
        _
      // Predicated region
      $region17: #{tpu_custom_call.1} parent=11 // pred_check
        %p217 = pneg %p138
      $region18: #{tpu_custom_call.1} parent=11 // pred_check_branch
        %219 = sbr.rel (%p217) target = $region20
      $region19: #{tpu_custom_call.1} parent=11 // pred_region
        %p220 = scmp.lt.s32.totalorder %s22, 0
        %s221 = scalar_select %p220, %s22, 0
        %s222 = scalar_lea.vmem %s3, %s221
      $region20: #{tpu_custom_call.1} parent=11 // pred_fallthru
        _
    $region12: #{tpu_custom_call.1} parent=5 // pred_fallthru
      _
    %p223 = scmp.lt.s32.totalorder %s11, 2
    // Predicated region
    $region21: #{tpu_custom_call.1} parent=5 // pred_check
      %p224 = pneg %p223
    $region22: #{tpu_custom_call.1} parent=5 // pred_check_branch
      %226 = sbr.rel (%p224) target = $region24
    $region23: #{tpu_custom_call.1} parent=5 // pred_region
      // Predicated region
      $region25: #{tpu_custom_call.1} parent=23 // pred_check
        %p227 = pneg %p52
      $region26: #{tpu_custom_call.1} parent=23 // pred_check_branch
        %229 = sbr.rel (%p227) target = $region28
      $region27: #{tpu_custom_call.1} parent=23 // pred_region
        %s230 = smul.u32 8, %s18
        %p231 = scmp.lt.s32.totalorder %s230, 15
        %s232 = scalar_select %p231, %s230, 15
        %p233 = scmp.lt.s32.totalorder %s20, 0
        %s234 = scalar_select %p233, %s20, 0
        %s235 = sadd.s32 %s234, %s232
        %s236 = smul.addr %s235, 8
        %s237 = scalar_lea.vmem %s0, %s236
        %s238 = smul.u32 8, %s18
      $region28: #{tpu_custom_call.1} parent=23 // pred_fallthru
        _
      // Predicated region
      $region29: #{tpu_custom_call.1} parent=23 // pred_check
        %p239 = pneg %p106
      $region30: #{tpu_custom_call.1} parent=23 // pred_check_branch
        %241 = sbr.rel (%p239) target = $region32
      $region31: #{tpu_custom_call.1} parent=23 // pred_region
        %s242 = smul.u32 8, %s18
        %p243 = scmp.lt.s32.totalorder %s242, 15
        %s244 = scalar_select %p243, %s242, 15
        %s245 = smul.addr %s244, 8
        %s246 = scalar_lea.vmem %s2, %s245
        %s247 = smul.u32 8, %s18
      $region32: #{tpu_custom_call.1} parent=23 // pred_fallthru
        _
      // Predicated region
      $region33: #{tpu_custom_call.1} parent=23 // pred_check
        %p248 = pneg %p158
      $region34: #{tpu_custom_call.1} parent=23 // pred_check_branch
        %250 = sbr.rel (%p248) target = $region36
      $region35: #{tpu_custom_call.1} parent=23 // pred_region
        %s251 = smul.u32 8, %s18
        %p252 = scmp.lt.s32.totalorder %s251, 15
        %s253 = scalar_select %p252, %s251, 15
        %s254 = smul.addr %s253, 8
        %s255 = scalar_lea.vmem %s4, %s254
        %s256 = smul.u32 8, %s18
      $region36: #{tpu_custom_call.1} parent=23 // pred_fallthru
        _
    $region24: #{tpu_custom_call.1} parent=5 // pred_fallthru
      _
    %p257 = scmp.le.s32.totalorder 1, %s11
    %p258 = scmp.lt.s32.totalorder %s11, 3
    %p259 = pnand %p257, %p258
    %p260 = pneg %p259
    // Predicated region
    $region37: #{tpu_custom_call.1} parent=5 // pred_check
      _
    $region38: #{tpu_custom_call.1} parent=5 // pred_check_branch
      %262 = sbr.rel (%p259) target = $region40
    $region39: #{tpu_custom_call.1} parent=5 // pred_region
      %s263 = ssub.s32 %s11, 1
      %s264 = smul.u32 8, %s21
      %p265 = scmp.lt.s32.totalorder %s264, 15
      %s266 = scalar_select %p265, %s264, 15
      %p267 = scmp.lt.s32.totalorder %s23, 0
      %s268 = scalar_select %p267, %s23, 0
      %s269 = sadd.s32 %s268, %s266
      %s270 = smul.addr %s269, 8
      %s271 = scalar_lea.vmem %s0, %s270
      %p272 = pneg %p58
      %p273 = pneg %p55
      %s274 = smul.u32 16, %s23
      %p275 = scmp.lt.s32.totalorder %s274, 15
      %s276 = scalar_select %p275, %s274, 15
      %p277 = scmp.lt.s32.totalorder %s22, 0
      %s278 = scalar_select %p277, %s22, 0
      %s279 = sadd.s32 %s278, %s276
      %s280 = smul.addr %s279, 8
      %s281 = scalar_lea.vmem %s1, %s280
      %p282 = pneg %p86
      %p283 = pneg %p83
      %s284 = smul.u32 8, %s21
      %p285 = scmp.lt.s32.totalorder %s284, 15
      %s286 = scalar_select %p285, %s284, 15
      %s287 = smul.addr %s286, 8
      %s288 = scalar_lea.vmem %s2, %s287
      %p289 = pneg %p112
      %p290 = pneg %p109
      %p291 = scmp.lt.s32.totalorder %s22, 0
      %s292 = scalar_select %p291, %s22, 0
      %s293 = scalar_lea.vmem %s3, %s292
      %p294 = pneg %p138
      %p295 = pneg %p135
      %s296 = smul.u32 8, %s21
      %p297 = scmp.lt.s32.totalorder %s296, 15
      %s298 = scalar_select %p297, %s296, 15
      %s299 = smul.addr %s298, 8
      %s300 = scalar_lea.vmem %s4, %s299
      %p301 = pneg %p164
      %p302 = pneg %p161
      %p303 = pneg %p190
      %p304 = pneg %p187
      %s305 = smul.u32 8, %s21
      %p306 = scmp.lt.s32.totalorder %s305, 15
      %s307 = scalar_select %p306, %s305, 15
      %s308 = smul.addr %s307, 8
      %s309 = scalar_lea.vmem %s5, %s308
      %s310 = smul.u32 8, %s21
      %p311 = scmp.lt.s32.totalorder %s310, 15
      %s312 = scalar_select %p311, %s310, 15
      %p313 = scmp.lt.s32.totalorder %s23, 0
      %s314 = scalar_select %p313, %s23, 0
      %s315 = sadd.s32 %s314, %s312
      %s316 = smul.addr %s315, 8
      %s317 = scalar_lea.vmem %s0, %s316
      %s318 = smul.u32 8, %s21
      %s319 = smul.u32 16, %s23
      %p320 = scmp.lt.s32.totalorder %s319, 15
      %s321 = scalar_select %p320, %s319, 15
      %p322 = scmp.lt.s32.totalorder %s22, 0
      %s323 = scalar_select %p322, %s22, 0
      %s324 = sadd.s32 %s323, %s321
      %s325 = smul.addr %s324, 8
      %s326 = scalar_lea.vmem %s1, %s325
      %s327 = smul.u32 16, %s23
      %s328 = smul.u32 8, %s21
      %p329 = scmp.lt.s32.totalorder %s328, 15
      %s330 = scalar_select %p329, %s328, 15
      %s331 = smul.addr %s330, 8
      %s332 = scalar_lea.vmem %s2, %s331
      %s333 = smul.u32 8, %s21
      %p334 = scmp.lt.s32.totalorder %s22, 0
      %s335 = scalar_select %p334, %s22, 0
      %s336 = scalar_lea.vmem %s3, %s335
      %s337 = smul.u32 8, %s21
      %p338 = scmp.lt.s32.totalorder %s337, 15
      %s339 = scalar_select %p338, %s337, 15
      %s340 = smul.addr %s339, 8
      %s341 = scalar_lea.vmem %s4, %s340
      %s342 = smul.u32 8, %s21
      %s343 = smul.u32 8, %s21
      %p344 = scmp.lt.s32.totalorder %s343, 15
      %s345 = scalar_select %p344, %s343, 15
      %s346 = smul.addr %s345, 8
      %s347 = scalar_lea.vmem %s5, %s346
      %s348 = smul.u32 8, %s21
      %p349 = scmp.eq.s32.totalorder %s22, 0
      // Predicated region
      $region41: #{tpu_custom_call.1} parent=39 // pred_check
        %p350 = pneg %p349
      $region42: #{tpu_custom_call.1} parent=39 // pred_check_branch
        %352 = sbr.rel (%p350) target = $region44
      $region43: #{tpu_custom_call.1} parent=39 // pred_region
        %vm353 = vcmask 7168
        %354 = vst.msk [vmem:[#allocation2] sm:$0xff] %vm353, -1e+30
        %355 = vst.msk [vmem:[#allocation2 + $0x8] sm:$0xff] %vm353, -1e+30
        %356 = vst.msk [vmem:[#allocation2 + $0x10] sm:$0xff] %vm353, -1e+30
        %357 = vst.msk [vmem:[#allocation2 + $0x18] sm:$0xff] %vm353, -1e+30
        %358 = vst.msk [vmem:[#allocation2 + $0x20] sm:$0xff] %vm353, -1e+30
        %359 = vst.msk [vmem:[#allocation2 + $0x28] sm:$0xff] %vm353, -1e+30
        %360 = vst.msk [vmem:[#allocation2 + $0x30] sm:$0xff] %vm353, -1e+30
        %361 = vst.msk [vmem:[#allocation2 + $0x38] sm:$0xff] %vm353, -1e+30
        %362 = vst.msk [vmem:[#allocation3] sm:$0xff] %vm353, 0.0
        %363 = vst.msk [vmem:[#allocation3 + $0x8] sm:$0xff] %vm353, 0.0
        %364 = vst.msk [vmem:[#allocation3 + $0x10] sm:$0xff] %vm353, 0.0
        %365 = vst.msk [vmem:[#allocation3 + $0x18] sm:$0xff] %vm353, 0.0
        %366 = vst.msk [vmem:[#allocation3 + $0x20] sm:$0xff] %vm353, 0.0
        %367 = vst.msk [vmem:[#allocation3 + $0x28] sm:$0xff] %vm353, 0.0
        %368 = vst.msk [vmem:[#allocation3 + $0x30] sm:$0xff] %vm353, 0.0
        %369 = vst.msk [vmem:[#allocation3 + $0x38] sm:$0xff] %vm353, 0.0
        %370 = vst.msk [vmem:[#allocation4] sm:$0xff] %vm353, 0.0
        %371 = vst.msk [vmem:[#allocation4 + $0x8] sm:$0xff] %vm353, 0.0
        %372 = vst.msk [vmem:[#allocation4 + $0x10] sm:$0xff] %vm353, 0.0
        %373 = vst.msk [vmem:[#allocation4 + $0x18] sm:$0xff] %vm353, 0.0
        %374 = vst.msk [vmem:[#allocation4 + $0x20] sm:$0xff] %vm353, 0.0
        %375 = vst.msk [vmem:[#allocation4 + $0x28] sm:$0xff] %vm353, 0.0
        %376 = vst.msk [vmem:[#allocation4 + $0x30] sm:$0xff] %vm353, 0.0
        %377 = vst.msk [vmem:[#allocation4 + $0x38] sm:$0xff] %vm353, 0.0
      $region44: #{tpu_custom_call.1} parent=39 // pred_fallthru
        _
      %v378 = vld [vmem:[%s317] sm:$0xff]
      %v379 = vld [vmem:[%s317 + $0x8] sm:$0xff]
      %v380 = vld [vmem:[%s317 + $0x10] sm:$0xff]
      %v381 = vld [vmem:[%s317 + $0x18] sm:$0xff]
      %v382 = vld [vmem:[%s317 + $0x20] sm:$0xff]
      %v383 = vld [vmem:[%s317 + $0x28] sm:$0xff]
      %v384 = vld [vmem:[%s317 + $0x30] sm:$0xff]
      %v385 = vld [vmem:[%s317 + $0x38] sm:$0xff]
      %v386 = vld [vmem:[%s326] sm:$0xff]
      %v387 = vld [vmem:[%s326 + $0x8] sm:$0xff]
      %v388 = vld [vmem:[%s326 + $0x10] sm:$0xff]
      %v389 = vld [vmem:[%s326 + $0x18] sm:$0xff]
      %v390 = vld [vmem:[%s326 + $0x20] sm:$0xff]
      %v391 = vld [vmem:[%s326 + $0x28] sm:$0xff]
      %v392 = vld [vmem:[%s326 + $0x30] sm:$0xff]
      %v393 = vld [vmem:[%s326 + $0x38] sm:$0xff]
      %v394 = vld [vmem:[%s326 + $0x40] sm:$0xff]
      %v395 = vld [vmem:[%s326 + $0x48] sm:$0xff]
      %v396 = vld [vmem:[%s326 + $0x50] sm:$0xff]
      %v397 = vld [vmem:[%s326 + $0x58] sm:$0xff]
      %v398 = vld [vmem:[%s326 + $0x60] sm:$0xff]
      %v399 = vld [vmem:[%s326 + $0x68] sm:$0xff]
      %v400 = vld [vmem:[%s326 + $0x70] sm:$0xff]
      %v401 = vld [vmem:[%s326 + $0x78] sm:$0xff]
      %402 = vmatpush.msra.mxu0 %v401
      %403 = vmatpush.msra.mxu0 %v400
      %404 = vmatpush.msra.mxu0 %v399
      %405 = vmatpush.msra.mxu0 %v398
      %406 = vmatpush.msra.mxu0 %v397
      %407 = vmatpush.msra.mxu0 %v396
      %408 = vmatpush.msra.mxu0 %v395
      %409 = vmatpush.msra.mxu0 %v394
      %410 = vmatpush.msra.mxu0 %v393
      %411 = vmatpush.msra.mxu0 %v392
      %412 = vmatpush.msra.mxu0 %v391
      %413 = vmatpush.msra.mxu0 %v390
      %414 = vmatpush.msra.mxu0 %v389
      %415 = vmatpush.msra.mxu0 %v388
      %416 = vmatpush.msra.mxu0 %v387
      %417 = vmatpush.msra.mxu0 %v386
      %418 = vmatmul.f32.gmra.mxu0 %v378
      %v419 = vpop.f32.mrf.mxu0
      %v420 = vadd.f32 0.0, %v419
      %421 = vmatmul.f32.gmra.mxu0 %v379
      %v422 = vpop.f32.mrf.mxu0
      %v423 = vadd.f32 0.0, %v422
      %424 = vmatmul.f32.gmra.mxu0 %v380
      %v425 = vpop.f32.mrf.mxu0
      %v426 = vadd.f32 0.0, %v425
      %427 = vmatmul.f32.gmra.mxu0 %v381
      %v428 = vpop.f32.mrf.mxu0
      %v429 = vadd.f32 0.0, %v428
      %430 = vmatmul.f32.gmra.mxu0 %v382
      %v431 = vpop.f32.mrf.mxu0
      %v432 = vadd.f32 0.0, %v431
      %433 = vmatmul.f32.gmra.mxu0 %v383
      %v434 = vpop.f32.mrf.mxu0
      %v435 = vadd.f32 0.0, %v434
      %436 = vmatmul.f32.gmra.mxu0 %v384
      %v437 = vpop.f32.mrf.mxu0
      %v438 = vadd.f32 0.0, %v437
      %439 = vmatmul.f32.gmra.mxu0 %v385
      %v440 = vpop.f32.mrf.mxu0
      %v441 = vadd.f32 0.0, %v440
      %442 = vdwg.mxu0
      %v443 = vmul.f32 %v420, 14.285714
      %v444 = vmul.f32 %v423, 14.285714
      %v445 = vmul.f32 %v426, 14.285714
      %v446 = vmul.f32 %v429, 14.285714
      %v447 = vmul.f32 %v432, 14.285714
      %v448 = vmul.f32 %v435, 14.285714
      %v449 = vmul.f32 %v438, 14.285714
      %v450 = vmul.f32 %v441, 14.285714
      %s451 = smul.u32 %s21, 64
      %v452 = vlaneseq
      %v453 = vshrl.u32 %v452, 7
      %v454 = vadd.s32 %v453, 8
      %v455 = vadd.s32 %v453, 16
      %v456 = vadd.s32 %v453, 24
      %v457 = vadd.s32 %v453, 32
      %v458 = vadd.s32 %v453, 40
      %v459 = vadd.s32 %v453, 48
      %v460 = vadd.s32 %v453, 56
      %v461 = vstv %s451
      %v462 = vadd.s32 %v461, %v453
      %v463 = vadd.s32 %v461, %v454
      %v464 = vadd.s32 %v461, %v455
      %v465 = vadd.s32 %v461, %v456
      %v466 = vadd.s32 %v461, %v457
      %v467 = vadd.s32 %v461, %v458
      %v468 = vadd.s32 %v461, %v459
      %v469 = vadd.s32 %v461, %v460
      %s470 = smul.u32 %s22, 128
      %v471 = vlaneseq
      %v472 = vand.u32 %v471, 127
      %v473 = vstv %s470
      %v474 = vadd.s32 %v473, %v472
      %v475 = vld [vmem:[%s332] sm:$0xff]
      %v476 = vld [vmem:[%s332 + $0x8] sm:$0xff]
      %v477 = vld [vmem:[%s332 + $0x10] sm:$0xff]
      %v478 = vld [vmem:[%s332 + $0x18] sm:$0xff]
      %v479 = vld [vmem:[%s332 + $0x20] sm:$0xff]
      %v480 = vld [vmem:[%s332 + $0x28] sm:$0xff]
      %v481 = vld [vmem:[%s332 + $0x30] sm:$0xff]
      %v482 = vld [vmem:[%s332 + $0x38] sm:$0xff]
      %v483 = vld [vmem:[%s336] sm:$0x1]
      %484 = vset.pattern.permute.xlu0 0
      %485 = vperm.xlu0 %484, %v475
      %v486 = vpop.permute.xlu0 %485
      %487 = vset.pattern.permute.xlu0 0
      %488 = vperm.xlu0 %487, %v476
      %v489 = vpop.permute.xlu0 %488
      %490 = vset.pattern.permute.xlu0 0
      %491 = vperm.xlu0 %490, %v477
      %v492 = vpop.permute.xlu0 %491
      %493 = vset.pattern.permute.xlu0 0
      %494 = vperm.xlu0 %493, %v478
      %v495 = vpop.permute.xlu0 %494
      %496 = vset.pattern.permute.xlu0 0
      %497 = vperm.xlu0 %496, %v479
      %v498 = vpop.permute.xlu0 %497
      %499 = vset.pattern.permute.xlu0 0
      %500 = vperm.xlu0 %499, %v480
      %v501 = vpop.permute.xlu0 %500
      %502 = vset.pattern.permute.xlu0 0
      %503 = vperm.xlu0 %502, %v481
      %v504 = vpop.permute.xlu0 %503
      %505 = vset.pattern.permute.xlu0 0
      %506 = vperm.xlu0 %505, %v482
      %v507 = vpop.permute.xlu0 %506
      %v508 = vperm.slane %v483, 0
      %vm509 = vcmp.eq.s32.totalorder %v486, %v508
      %vm510 = vcmp.eq.s32.totalorder %v489, %v508
      %vm511 = vcmp.eq.s32.totalorder %v492, %v508
      %vm512 = vcmp.eq.s32.totalorder %v495, %v508
      %vm513 = vcmp.eq.s32.totalorder %v498, %v508
      %vm514 = vcmp.eq.s32.totalorder %v501, %v508
      %vm515 = vcmp.eq.s32.totalorder %v504, %v508
      %vm516 = vcmp.eq.s32.totalorder %v507, %v508
      %vm517 = vcmp.lt.s32.totalorder %v474, 8
      %v518 = vsel %vm517, 1, 0
      %vm519 = vcmp.eq.s32.totalorder %v518, 1
      %v520 = vsel %vm519, %v443, -1e+30
      %v521 = vsel %vm519, %v444, -1e+30
      %v522 = vsel %vm519, %v445, -1e+30
      %v523 = vsel %vm519, %v446, -1e+30
      %v524 = vsel %vm519, %v447, -1e+30
      %v525 = vsel %vm519, %v448, -1e+30
      %v526 = vsel %vm519, %v449, -1e+30
      %v527 = vsel %vm519, %v450, -1e+30
      %vm528 = vmand %vm509, %vm519
      %vm529 = vmand %vm510, %vm519
      %vm530 = vmand %vm511, %vm519
      %vm531 = vmand %vm512, %vm519
      %vm532 = vmand %vm513, %vm519
      %vm533 = vmand %vm514, %vm519
      %vm534 = vmand %vm515, %vm519
      %vm535 = vmand %vm516, %vm519
      %v536 = vsel %vm528, 1, 0
      %v537 = vsel %vm529, 1, 0
      %v538 = vsel %vm530, 1, 0
      %v539 = vsel %vm531, 1, 0
      %v540 = vsel %vm532, 1, 0
      %v541 = vsel %vm533, 1, 0
      %v542 = vsel %vm534, 1, 0
      %v543 = vsel %vm535, 1, 0
      %v544 = vcvt.s32.f32 %v536
      %v545 = vcvt.s32.f32 %v537
      %v546 = vcvt.s32.f32 %v538
      %v547 = vcvt.s32.f32 %v539
      %v548 = vcvt.s32.f32 %v540
      %v549 = vcvt.s32.f32 %v541
      %v550 = vcvt.s32.f32 %v542
      %v551 = vcvt.s32.f32 %v543
      %v552 = vld [vmem:[#allocation2] sm:$0xff]
      %v553 = vld [vmem:[#allocation2 + $0x8] sm:$0xff]
      %v554 = vld [vmem:[#allocation2 + $0x10] sm:$0xff]
      %v555 = vld [vmem:[#allocation2 + $0x18] sm:$0xff]
      %v556 = vld [vmem:[#allocation2 + $0x20] sm:$0xff]
      %v557 = vld [vmem:[#allocation2 + $0x28] sm:$0xff]
      %v558 = vld [vmem:[#allocation2 + $0x30] sm:$0xff]
      %v559 = vld [vmem:[#allocation2 + $0x38] sm:$0xff]
      %560 = vmax.xlane.f32.xlu0 %v520
      %v561 = vpop.xlane.xlu0 %560
      %562 = vmax.xlane.f32.xlu0 %v521
      %v563 = vpop.xlane.xlu0 %562
      %564 = vmax.xlane.f32.xlu0 %v522
      %v565 = vpop.xlane.xlu0 %564
      %566 = vmax.xlane.f32.xlu0 %v523
      %v567 = vpop.xlane.xlu0 %566
      %568 = vmax.xlane.f32.xlu0 %v524
      %v569 = vpop.xlane.xlu0 %568
      %570 = vmax.xlane.f32.xlu0 %v525
      %v571 = vpop.xlane.xlu0 %570
      %572 = vmax.xlane.f32.xlu0 %v526
      %v573 = vpop.xlane.xlu0 %572
      %574 = vmax.xlane.f32.xlu0 %v527
      %v575 = vpop.xlane.xlu0 %574
      %v576 = vmax.f32 %v552, %v561
      %v577 = vmax.f32 %v553, %v563
      %v578 = vmax.f32 %v554, %v565
      %v579 = vmax.f32 %v555, %v567
      %v580 = vmax.f32 %v556, %v569
      %v581 = vmax.f32 %v557, %v571
      %v582 = vmax.f32 %v558, %v573
      %v583 = vmax.f32 %v559, %v575
      %vm584 = vcmp.eq.s32.totalorder %v462, %v474
      %vm585 = vcmp.eq.s32.totalorder %v463, %v474
      %vm586 = vcmp.eq.s32.totalorder %v464, %v474
      %vm587 = vcmp.eq.s32.totalorder %v465, %v474
      %vm588 = vcmp.eq.s32.totalorder %v466, %v474
      %vm589 = vcmp.eq.s32.totalorder %v467, %v474
      %vm590 = vcmp.eq.s32.totalorder %v468, %v474
      %vm591 = vcmp.eq.s32.totalorder %v469, %v474
      %v592 = vsel %vm584, -1e+30, %v520
      %v593 = vsel %vm585, -1e+30, %v521
      %v594 = vsel %vm586, -1e+30, %v522
      %v595 = vsel %vm587, -1e+30, %v523
      %v596 = vsel %vm588, -1e+30, %v524
      %v597 = vsel %vm589, -1e+30, %v525
      %v598 = vsel %vm590, -1e+30, %v526
      %v599 = vsel %vm591, -1e+30, %v527
      %v600 = vsub.f32 %v552, %v576
      %v601 = vsub.f32 %v553, %v577
      %v602 = vsub.f32 %v554, %v578
      %v603 = vsub.f32 %v555, %v579
      %v604 = vsub.f32 %v556, %v580
      %v605 = vsub.f32 %v557, %v581
      %v606 = vsub.f32 %v558, %v582
      %v607 = vsub.f32 %v559, %v583
      %v608 = vmul.f32 %v600, 1.442695
      %v609 = vpow.pop %v608
      %v610 = vmul.f32 %v601, 1.442695
      %v611 = vpow.pop %v610
      %v612 = vmul.f32 %v602, 1.442695
      %v613 = vpow.pop %v612
      %v614 = vmul.f32 %v603, 1.442695
      %v615 = vpow.pop %v614
      %v616 = vmul.f32 %v604, 1.442695
      %v617 = vpow.pop %v616
      %v618 = vmul.f32 %v605, 1.442695
      %v619 = vpow.pop %v618
      %v620 = vmul.f32 %v606, 1.442695
      %v621 = vpow.pop %v620
      %v622 = vmul.f32 %v607, 1.442695
      %v623 = vpow.pop %v622
      %v624 = vld [vmem:[#allocation3] sm:$0xff]
      %v625 = vld [vmem:[#allocation3 + $0x8] sm:$0xff]
      %v626 = vld [vmem:[#allocation3 + $0x10] sm:$0xff]
      %v627 = vld [vmem:[#allocation3 + $0x18] sm:$0xff]
      %v628 = vld [vmem:[#allocation3 + $0x20] sm:$0xff]
      %v629 = vld [vmem:[#allocation3 + $0x28] sm:$0xff]
      %v630 = vld [vmem:[#allocation3 + $0x30] sm:$0xff]
      %v631 = vld [vmem:[#allocation3 + $0x38] sm:$0xff]
      %v632 = vmul.f32 %v609, %v624
      %v633 = vmul.f32 %v611, %v625
      %v634 = vmul.f32 %v613, %v626
      %v635 = vmul.f32 %v615, %v627
      %v636 = vmul.f32 %v617, %v628
      %v637 = vmul.f32 %v619, %v629
      %v638 = vmul.f32 %v621, %v630
      %v639 = vmul.f32 %v623, %v631
      %641 = vset.pattern.permute.xlu0 0
      %642 = vperm.xlu0 %641, %v576
      %v643 = vpop.permute.xlu0 %642
      %646 = vset.pattern.permute.xlu0 0
      %647 = vperm.xlu0 %646, %v577
      %v648 = vpop.permute.xlu0 %647
      %651 = vset.pattern.permute.xlu0 0
      %652 = vperm.xlu0 %651, %v578
      %v653 = vpop.permute.xlu0 %652
      %656 = vset.pattern.permute.xlu0 0
      %657 = vperm.xlu0 %656, %v579
      %v658 = vpop.permute.xlu0 %657
      %661 = vset.pattern.permute.xlu0 0
      %662 = vperm.xlu0 %661, %v580
      %v663 = vpop.permute.xlu0 %662
      %666 = vset.pattern.permute.xlu0 0
      %667 = vperm.xlu0 %666, %v581
      %v668 = vpop.permute.xlu0 %667
      %671 = vset.pattern.permute.xlu0 0
      %672 = vperm.xlu0 %671, %v582
      %v673 = vpop.permute.xlu0 %672
      %676 = vset.pattern.permute.xlu0 0
      %677 = vperm.xlu0 %676, %v583
      %v678 = vpop.permute.xlu0 %677
      %v680 = vsub.f32 %v592, %v643
      %v681 = vsub.f32 %v593, %v648
      %v682 = vsub.f32 %v594, %v653
      %v683 = vsub.f32 %v595, %v658
      %v684 = vsub.f32 %v596, %v663
      %v685 = vsub.f32 %v597, %v668
      %v686 = vsub.f32 %v598, %v673
      %v687 = vsub.f32 %v599, %v678
      %v688 = vmul.f32 %v680, 1.442695
      %v689 = vpow.pop %v688
      %v690 = vmul.f32 %v681, 1.442695
      %v691 = vpow.pop %v690
      %v692 = vmul.f32 %v682, 1.442695
      %v693 = vpow.pop %v692
      %v694 = vmul.f32 %v683, 1.442695
      %v695 = vpow.pop %v694
      %v696 = vmul.f32 %v684, 1.442695
      %v697 = vpow.pop %v696
      %v698 = vmul.f32 %v685, 1.442695
      %v699 = vpow.pop %v698
      %v700 = vmul.f32 %v686, 1.442695
      %v701 = vpow.pop %v700
      %v702 = vmul.f32 %v687, 1.442695
      %v703 = vpow.pop %v702
      %704 = vadd.xlane.f32.xlu0 %v689
      %v705 = vpop.xlane.xlu0 %704
      %706 = vadd.xlane.f32.xlu0 %v691
      %v707 = vpop.xlane.xlu0 %706
      %708 = vadd.xlane.f32.xlu0 %v693
      %v709 = vpop.xlane.xlu0 %708
      %710 = vadd.xlane.f32.xlu0 %v695
      %v711 = vpop.xlane.xlu0 %710
      %712 = vadd.xlane.f32.xlu0 %v697
      %v713 = vpop.xlane.xlu0 %712
      %714 = vadd.xlane.f32.xlu0 %v699
      %v715 = vpop.xlane.xlu0 %714
      %716 = vadd.xlane.f32.xlu0 %v701
      %v717 = vpop.xlane.xlu0 %716
      %718 = vadd.xlane.f32.xlu0 %v703
      %v719 = vpop.xlane.xlu0 %718
      %v720 = vadd.f32 %v632, %v705
      %v721 = vadd.f32 %v633, %v707
      %v722 = vadd.f32 %v634, %v709
      %v723 = vadd.f32 %v635, %v711
      %v724 = vadd.f32 %v636, %v713
      %v725 = vadd.f32 %v637, %v715
      %v726 = vadd.f32 %v638, %v717
      %v727 = vadd.f32 %v639, %v719
      %vm728 = vcmask 7168
      %729 = vst.msk [vmem:[#allocation3] sm:$0xff] %vm728, %v720
      %730 = vst.msk [vmem:[#allocation3 + $0x8] sm:$0xff] %vm728, %v721
      %731 = vst.msk [vmem:[#allocation3 + $0x10] sm:$0xff] %vm728, %v722
      %732 = vst.msk [vmem:[#allocation3 + $0x18] sm:$0xff] %vm728, %v723
      %733 = vst.msk [vmem:[#allocation3 + $0x20] sm:$0xff] %vm728, %v724
      %734 = vst.msk [vmem:[#allocation3 + $0x28] sm:$0xff] %vm728, %v725
      %735 = vst.msk [vmem:[#allocation3 + $0x30] sm:$0xff] %vm728, %v726
      %736 = vst.msk [vmem:[#allocation3 + $0x38] sm:$0xff] %vm728, %v727
      %v737 = vld [vmem:[#allocation4] sm:$0xff]
      %v738 = vld [vmem:[#allocation4 + $0x8] sm:$0xff]
      %v739 = vld [vmem:[#allocation4 + $0x10] sm:$0xff]
      %v740 = vld [vmem:[#allocation4 + $0x18] sm:$0xff]
      %v741 = vld [vmem:[#allocation4 + $0x20] sm:$0xff]
      %v742 = vld [vmem:[#allocation4 + $0x28] sm:$0xff]
      %v743 = vld [vmem:[#allocation4 + $0x30] sm:$0xff]
      %v744 = vld [vmem:[#allocation4 + $0x38] sm:$0xff]
      %v745 = vmul.f32 %v544, %v520
      %v746 = vmul.f32 %v545, %v521
      %v747 = vmul.f32 %v546, %v522
      %v748 = vmul.f32 %v547, %v523
      %v749 = vmul.f32 %v548, %v524
      %v750 = vmul.f32 %v549, %v525
      %v751 = vmul.f32 %v550, %v526
      %v752 = vmul.f32 %v551, %v527
      %753 = vadd.xlane.f32.xlu0 %v745
      %v754 = vpop.xlane.xlu0 %753
      %755 = vadd.xlane.f32.xlu0 %v746
      %v756 = vpop.xlane.xlu0 %755
      %757 = vadd.xlane.f32.xlu0 %v747
      %v758 = vpop.xlane.xlu0 %757
      %759 = vadd.xlane.f32.xlu0 %v748
      %v760 = vpop.xlane.xlu0 %759
      %761 = vadd.xlane.f32.xlu0 %v749
      %v762 = vpop.xlane.xlu0 %761
      %763 = vadd.xlane.f32.xlu0 %v750
      %v764 = vpop.xlane.xlu0 %763
      %765 = vadd.xlane.f32.xlu0 %v751
      %v766 = vpop.xlane.xlu0 %765
      %767 = vadd.xlane.f32.xlu0 %v752
      %v768 = vpop.xlane.xlu0 %767
      %v769 = vadd.f32 %v737, %v754
      %v770 = vadd.f32 %v738, %v756
      %v771 = vadd.f32 %v739, %v758
      %v772 = vadd.f32 %v740, %v760
      %v773 = vadd.f32 %v741, %v762
      %v774 = vadd.f32 %v742, %v764
      %v775 = vadd.f32 %v743, %v766
      %v776 = vadd.f32 %v744, %v768
      %777 = vst.msk [vmem:[#allocation4] sm:$0xff] %vm728, %v769
      %778 = vst.msk [vmem:[#allocation4 + $0x8] sm:$0xff] %vm728, %v770
      %779 = vst.msk [vmem:[#allocation4 + $0x10] sm:$0xff] %vm728, %v771
      %780 = vst.msk [vmem:[#allocation4 + $0x18] sm:$0xff] %vm728, %v772
      %781 = vst.msk [vmem:[#allocation4 + $0x20] sm:$0xff] %vm728, %v773
      %782 = vst.msk [vmem:[#allocation4 + $0x28] sm:$0xff] %vm728, %v774
      %783 = vst.msk [vmem:[#allocation4 + $0x30] sm:$0xff] %vm728, %v775
      %784 = vst.msk [vmem:[#allocation4 + $0x38] sm:$0xff] %vm728, %v776
      %785 = vst.msk [vmem:[#allocation2] sm:$0xff] %vm728, %v576
      %786 = vst.msk [vmem:[#allocation2 + $0x8] sm:$0xff] %vm728, %v577
      %787 = vst.msk [vmem:[#allocation2 + $0x10] sm:$0xff] %vm728, %v578
      %788 = vst.msk [vmem:[#allocation2 + $0x18] sm:$0xff] %vm728, %v579
      %789 = vst.msk [vmem:[#allocation2 + $0x20] sm:$0xff] %vm728, %v580
      %790 = vst.msk [vmem:[#allocation2 + $0x28] sm:$0xff] %vm728, %v581
      %791 = vst.msk [vmem:[#allocation2 + $0x30] sm:$0xff] %vm728, %v582
      %792 = vst.msk [vmem:[#allocation2 + $0x38] sm:$0xff] %vm728, %v583
      // Predicated region
      $region45: #{tpu_custom_call.1} parent=39 // pred_check
        %p793 = pneg %p349
      $region46: #{tpu_custom_call.1} parent=39 // pred_check_branch
        %795 = sbr.rel (%p793) target = $region48
      $region47: #{tpu_custom_call.1} parent=39 // pred_region
        %v796 = vld [vmem:[#allocation4] sm:$0xff]
        %v797 = vld [vmem:[#allocation4 + $0x8] sm:$0xff]
        %v798 = vld [vmem:[#allocation4 + $0x10] sm:$0xff]
        %v799 = vld [vmem:[#allocation4 + $0x18] sm:$0xff]
        %v800 = vld [vmem:[#allocation4 + $0x20] sm:$0xff]
        %v801 = vld [vmem:[#allocation4 + $0x28] sm:$0xff]
        %v802 = vld [vmem:[#allocation4 + $0x30] sm:$0xff]
        %v803 = vld [vmem:[#allocation4 + $0x38] sm:$0xff]
        %v804 = vld [vmem:[%s341] sm:$0xff]
        %v805 = vld [vmem:[%s341 + $0x8] sm:$0xff]
        %v806 = vld [vmem:[%s341 + $0x10] sm:$0xff]
        %v807 = vld [vmem:[%s341 + $0x18] sm:$0xff]
        %v808 = vld [vmem:[%s341 + $0x20] sm:$0xff]
        %v809 = vld [vmem:[%s341 + $0x28] sm:$0xff]
        %v810 = vld [vmem:[%s341 + $0x30] sm:$0xff]
        %v811 = vld [vmem:[%s341 + $0x38] sm:$0xff]
        %v812 = vrcp.pop %v804
        %v813 = vmul.f32 %v804, %v812
        %v814 = vsub.f32 1.0, %v813
        %v815 = vmul.f32 %v812, %v814
        %v816 = vadd.f32 %v812, %v815
        %vm817 = vweird.f32 %v804
        %vm818 = vweird.f32 %v812
        %vm819 = vmor %vm817, %vm818
        %v820 = vsel %vm819, %v812, %v816
        %v821 = vand.u32 2147483647, %v804
        %vm822 = vcmp.eq.f32.partialorder %v821, 8.507059e+37
        %v823 = vand.u32 %v804, 2147483648
        %v824 = vor.u32 1.1754944e-38, %v823
        %v825 = vsel %vm822, %v824, %v820
        %v826 = vmul.f32 %v796, %v825
        %v827 = vrcp.pop %v805
        %v828 = vmul.f32 %v805, %v827
        %v829 = vsub.f32 1.0, %v828
        %v830 = vmul.f32 %v827, %v829
        %v831 = vadd.f32 %v827, %v830
        %vm832 = vweird.f32 %v805
        %vm833 = vweird.f32 %v827
        %vm834 = vmor %vm832, %vm833
        %v835 = vsel %vm834, %v827, %v831
        %v836 = vand.u32 2147483647, %v805
        %vm837 = vcmp.eq.f32.partialorder %v836, 8.507059e+37
        %v838 = vand.u32 %v805, 2147483648
        %v839 = vor.u32 1.1754944e-38, %v838
        %v840 = vsel %vm837, %v839, %v835
        %v841 = vmul.f32 %v797, %v840
        %v842 = vrcp.pop %v806
        %v843 = vmul.f32 %v806, %v842
        %v844 = vsub.f32 1.0, %v843
        %v845 = vmul.f32 %v842, %v844
        %v846 = vadd.f32 %v842, %v845
        %vm847 = vweird.f32 %v806
        %vm848 = vweird.f32 %v842
        %vm849 = vmor %vm847, %vm848
        %v850 = vsel %vm849, %v842, %v846
        %v851 = vand.u32 2147483647, %v806
        %vm852 = vcmp.eq.f32.partialorder %v851, 8.507059e+37
        %v853 = vand.u32 %v806, 2147483648
        %v854 = vor.u32 1.1754944e-38, %v853
        %v855 = vsel %vm852, %v854, %v850
        %v856 = vmul.f32 %v798, %v855
        %v857 = vrcp.pop %v807
        %v858 = vmul.f32 %v807, %v857
        %v859 = vsub.f32 1.0, %v858
        %v860 = vmul.f32 %v857, %v859
        %v861 = vadd.f32 %v857, %v860
        %vm862 = vweird.f32 %v807
        %vm863 = vweird.f32 %v857
        %vm864 = vmor %vm862, %vm863
        %v865 = vsel %vm864, %v857, %v861
        %v866 = vand.u32 2147483647, %v807
        %vm867 = vcmp.eq.f32.partialorder %v866, 8.507059e+37
        %v868 = vand.u32 %v807, 2147483648
        %v869 = vor.u32 1.1754944e-38, %v868
        %v870 = vsel %vm867, %v869, %v865
        %v871 = vmul.f32 %v799, %v870
        %v872 = vrcp.pop %v808
        %v873 = vmul.f32 %v808, %v872
        %v874 = vsub.f32 1.0, %v873
        %v875 = vmul.f32 %v872, %v874
        %v876 = vadd.f32 %v872, %v875
        %vm877 = vweird.f32 %v808
        %vm878 = vweird.f32 %v872
        %vm879 = vmor %vm877, %vm878
        %v880 = vsel %vm879, %v872, %v876
        %v881 = vand.u32 2147483647, %v808
        %vm882 = vcmp.eq.f32.partialorder %v881, 8.507059e+37
        %v883 = vand.u32 %v808, 2147483648
        %v884 = vor.u32 1.1754944e-38, %v883
        %v885 = vsel %vm882, %v884, %v880
        %v886 = vmul.f32 %v800, %v885
        %v887 = vrcp.pop %v809
        %v888 = vmul.f32 %v809, %v887
        %v889 = vsub.f32 1.0, %v888
        %v890 = vmul.f32 %v887, %v889
        %v891 = vadd.f32 %v887, %v890
        %vm892 = vweird.f32 %v809
        %vm893 = vweird.f32 %v887
        %vm894 = vmor %vm892, %vm893
        %v895 = vsel %vm894, %v887, %v891
        %v896 = vand.u32 2147483647, %v809
        %vm897 = vcmp.eq.f32.partialorder %v896, 8.507059e+37
        %v898 = vand.u32 %v809, 2147483648
        %v899 = vor.u32 1.1754944e-38, %v898
        %v900 = vsel %vm897, %v899, %v895
        %v901 = vmul.f32 %v801, %v900
        %v902 = vrcp.pop %v810
        %v903 = vmul.f32 %v810, %v902
        %v904 = vsub.f32 1.0, %v903
        %v905 = vmul.f32 %v902, %v904
        %v906 = vadd.f32 %v902, %v905
        %vm907 = vweird.f32 %v810
        %vm908 = vweird.f32 %v902
        %vm909 = vmor %vm907, %vm908
        %v910 = vsel %vm909, %v902, %v906
        %v911 = vand.u32 2147483647, %v810
        %vm912 = vcmp.eq.f32.partialorder %v911, 8.507059e+37
        %v913 = vand.u32 %v810, 2147483648
        %v914 = vor.u32 1.1754944e-38, %v913
        %v915 = vsel %vm912, %v914, %v910
        %v916 = vmul.f32 %v802, %v915
        %v917 = vrcp.pop %v811
        %v918 = vmul.f32 %v811, %v917
        %v919 = vsub.f32 1.0, %v918
        %v920 = vmul.f32 %v917, %v919
        %v921 = vadd.f32 %v917, %v920
        %vm922 = vweird.f32 %v811
        %vm923 = vweird.f32 %v917
        %vm924 = vmor %vm922, %vm923
        %v925 = vsel %vm924, %v917, %v921
        %v926 = vand.u32 2147483647, %v811
        %vm927 = vcmp.eq.f32.partialorder %v926, 8.507059e+37
        %v928 = vand.u32 %v811, 2147483648
        %v929 = vor.u32 1.1754944e-38, %v928
        %v930 = vsel %vm927, %v929, %v925
        %v931 = vmul.f32 %v803, %v930
        %v932 = vld [vmem:[#allocation2] sm:$0xff]
        %v933 = vld [vmem:[#allocation2 + $0x8] sm:$0xff]
        %v934 = vld [vmem:[#allocation2 + $0x10] sm:$0xff]
        %v935 = vld [vmem:[#allocation2 + $0x18] sm:$0xff]
        %v936 = vld [vmem:[#allocation2 + $0x20] sm:$0xff]
        %v937 = vld [vmem:[#allocation2 + $0x28] sm:$0xff]
        %v938 = vld [vmem:[#allocation2 + $0x30] sm:$0xff]
        %v939 = vld [vmem:[#allocation2 + $0x38] sm:$0xff]
        %v940 = vsub.f32 %v826, %v932
        %v941 = vsub.f32 %v841, %v933
        %v942 = vsub.f32 %v856, %v934
        %v943 = vsub.f32 %v871, %v935
        %v944 = vsub.f32 %v886, %v936
        %v945 = vsub.f32 %v901, %v937
        %v946 = vsub.f32 %v916, %v938
        %v947 = vsub.f32 %v931, %v939
        %v948 = vld [vmem:[#allocation3] sm:$0xff]
        %v949 = vld [vmem:[#allocation3 + $0x8] sm:$0xff]
        %v950 = vld [vmem:[#allocation3 + $0x10] sm:$0xff]
        %v951 = vld [vmem:[#allocation3 + $0x18] sm:$0xff]
        %v952 = vld [vmem:[#allocation3 + $0x20] sm:$0xff]
        %v953 = vld [vmem:[#allocation3 + $0x28] sm:$0xff]
        %v954 = vld [vmem:[#allocation3 + $0x30] sm:$0xff]
        %v955 = vld [vmem:[#allocation3 + $0x38] sm:$0xff]
        %v956 = vadd.f32 %v948, 1e-12
        %v957 = vadd.f32 %v949, 1e-12
        %v958 = vadd.f32 %v950, 1e-12
        %v959 = vadd.f32 %v951, 1e-12
        %v960 = vadd.f32 %v952, 1e-12
        %v961 = vadd.f32 %v953, 1e-12
        %v962 = vadd.f32 %v954, 1e-12
        %v963 = vadd.f32 %v955, 1e-12
        %v964 = vlog2.pop %v956
        %v965 = vmul.f32 %v964, 0.6931472
        %v966 = vlog2.pop %v957
        %v967 = vmul.f32 %v966, 0.6931472
        %v968 = vlog2.pop %v958
        %v969 = vmul.f32 %v968, 0.6931472
        %v970 = vlog2.pop %v959
        %v971 = vmul.f32 %v970, 0.6931472
        %v972 = vlog2.pop %v960
        %v973 = vmul.f32 %v972, 0.6931472
        %v974 = vlog2.pop %v961
        %v975 = vmul.f32 %v974, 0.6931472
        %v976 = vlog2.pop %v962
        %v977 = vmul.f32 %v976, 0.6931472
        %v978 = vlog2.pop %v963
        %v979 = vmul.f32 %v978, 0.6931472
        %v980 = vsub.f32 %v940, %v965
        %v981 = vsub.f32 %v941, %v967
        %v982 = vsub.f32 %v942, %v969
        %v983 = vsub.f32 %v943, %v971
        %v984 = vsub.f32 %v944, %v973
        %v985 = vsub.f32 %v945, %v975
        %v986 = vsub.f32 %v946, %v977
        %v987 = vsub.f32 %v947, %v979
        %988 = vst.msk [vmem:[%s347] sm:$0xff] %vm728, %v980
        %989 = vst.msk [vmem:[%s347 + $0x8] sm:$0xff] %vm728, %v981
        %990 = vst.msk [vmem:[%s347 + $0x10] sm:$0xff] %vm728, %v982
        %991 = vst.msk [vmem:[%s347 + $0x18] sm:$0xff] %vm728, %v983
        %992 = vst.msk [vmem:[%s347 + $0x20] sm:$0xff] %vm728, %v984
        %993 = vst.msk [vmem:[%s347 + $0x28] sm:$0xff] %vm728, %v985
        %994 = vst.msk [vmem:[%s347 + $0x30] sm:$0xff] %vm728, %v986
        %995 = vst.msk [vmem:[%s347 + $0x38] sm:$0xff] %vm728, %v987
      $region48: #{tpu_custom_call.1} parent=39 // pred_fallthru
        _
      %s996 = smul.u32 8, %s21
      %p997 = scmp.lt.s32.totalorder %s996, 15
      %s998 = scalar_select %p997, %s996, 15
      %s999 = smul.addr %s998, 8
      %s1000 = scalar_lea.vmem %s5, %s999
      // Predicated region
      $region49: #{tpu_custom_call.1} parent=39 // pred_check
        %p1001 = pneg %p187
      $region50: #{tpu_custom_call.1} parent=39 // pred_check_branch
        %1003 = sbr.rel (%p1001) target = $region52
      $region51: #{tpu_custom_call.1} parent=39 // pred_region
        %s1004 = smul.u32 8, %s21
      $region52: #{tpu_custom_call.1} parent=39 // pred_fallthru
        _
    $region40: #{tpu_custom_call.1} parent=5 // pred_fallthru
      _
    %p1005 = scmp.le.s32.totalorder 2, %s11
    // Predicated region
    $region53: #{tpu_custom_call.1} parent=5 // pred_check
      %p1006 = pneg %p1005
    $region54: #{tpu_custom_call.1} parent=5 // pred_check_branch
      %1008 = sbr.rel (%p1006) target = $region56
    $region55: #{tpu_custom_call.1} parent=5 // pred_region
      %s1009 = ssub.s32 %s11, 2
      // Predicated region
      $region57: #{tpu_custom_call.1} parent=55 // pred_check
        %p1010 = pneg %p193
      $region58: #{tpu_custom_call.1} parent=55 // pred_check_branch
        %1012 = sbr.rel (%p1010) target = $region60
      $region59: #{tpu_custom_call.1} parent=55 // pred_region
        %s1013 = smul.u32 8, %s24
        %p1014 = scmp.lt.s32.totalorder %s1013, 15
        %s1015 = scalar_select %p1014, %s1013, 15
        %s1016 = smul.addr %s1015, 8
        %s1017 = scalar_lea.vmem %s5, %s1016
      $region60: #{tpu_custom_call.1} parent=55 // pred_fallthru
        _
    $region56: #{tpu_custom_call.1} parent=5 // pred_fallthru
      _
  $region6: #{tpu_custom_call.1} parent=0 // loop_footer
    %s15 = sadd.s32 1, %s11
  $region7: #{tpu_custom_call.1} parent=0 // loop_footer_branch
    %10 = sbr.rel target = $region3
  $region8: #{tpu_custom_call.1} parent=0 // loop_exit
    _

</llo_original>
